<compile_context>
chip_gen: v6e
topology: v6e:2x2x1
jax: 0.10.0
libtpu: 0.0.40
codegen_flags: <defaults>
</compile_context>

<pallas_src>
import jax
import jax.numpy as jnp
from jax.experimental import pallas as pl
from jax.experimental.pallas import tpu as pltpu

LANE = 128
SUBLANE = 8


def _vmem_capacity_bytes():
    try:
        return int(pltpu.get_tpu_info().vmem_capacity_bytes)
    except Exception:
        return 64 * 1024 * 1024  # conservative (v7x per-TC VMEM)


def mlp_hypernetwork(x, w1, b1, w2, b2, *, tile_n=None,
                     weight_dtype=jnp.bfloat16, buffer_depth=2):
    """x: [B, D] f32; w1: [D, H]; b1: [H]; w2: [H, N]; b2: [N].  Returns [B, N] f32."""
    B, D = x.shape
    H = w1.shape[1]
    N = w2.shape[1]
    assert N % LANE == 0, "fc2 out_features must be a multiple of 128 (624,288,000 is)"

    # ---- fc1 (+ ReLU): tiny, done once in plain JAX --------------------------------------
    h = jnp.maximum(x @ w1 + b1, 0.0)                       # [B, H]
    h_flat = h.reshape(B * H).astype(jnp.float32)           # SMEM scalars

    # ---- fc2 streams: bf16, lane/sublane-dense [*, rows, 128]; no concat / pad / copy ----
    rows = N // LANE
    w2_r = w2.astype(weight_dtype).reshape(H, rows, LANE)   # [H, rows, 128]
    b2_r = b2.astype(weight_dtype).reshape(1, rows, LANE)   # [1, rows, 128]

    # ---- tile sizing: amortize per-step overhead, stay inside VMEM ------------------------
    vmem_cap = _vmem_capacity_bytes()
    if tile_n is None:
        tile_n = 524288 if vmem_cap >= (100 << 20) else 262144
    assert tile_n % (SUBLANE * LANE) == 0, "tile_n must be a multiple of 1024"
    tnr = tile_n // LANE                                     # rows per tile (multiple of 8)
    tnr = max(SUBLANE, min(tnr, pl.cdiv(rows, SUBLANE) * SUBLANE))
    grid = (pl.cdiv(rows, tnr),)                             # ragged last block: OOB writes masked

    w_isz = jnp.dtype(weight_dtype).itemsize
    o_isz = jnp.dtype(x.dtype).itemsize

    def kernel(h_ref, w2_ref, b2_ref, o_ref):
        # h_ref: [B*H] f32 SMEM; w2_ref: [H,tnr,128] bf16; b2_ref: [1,tnr,128] bf16;
        # o_ref: [B,tnr,128] f32.
        # k-outer with B accumulators: each weight-row chunk is read from VMEM once
        # and reused for every batch row.  B, H tiny -> unrolled at trace time.
        bias = b2_ref[0].astype(jnp.float32)
        acc = [bias] * B
        for k in range(H):
            wk = w2_ref[k].astype(jnp.float32)
            for b in range(B):
                acc[b] = acc[b] + h_ref[b * H + k] * wk
        for b in range(B):
            o_ref[b] = acc[b].astype(o_ref.dtype)

    # Optional deeper buffering on the streamed inputs (v7x); default 2 = plain double-buffer.
    stream_kwargs = {} if buffer_depth == 2 else {"pipeline_mode": pl.Buffered(buffer_depth)}

    # VMEM budget: buffered weight+bias blocks, double-buffered output block, f32 intermediates.
    in_block_bytes = (H + 1) * w_isz * tnr * LANE
    out_block_bytes = B * o_isz * tnr * LANE
    interm_bytes = (B + 2) * 4 * tnr * LANE
    needed = buffer_depth * in_block_bytes + 2 * out_block_bytes + interm_bytes + (4 << 20)
    vmem_limit = int(min(max(needed, 32 << 20), vmem_cap - (4 << 20)))

    out = pl.pallas_call(
        kernel,
        out_shape=jax.ShapeDtypeStruct((B, rows, LANE), x.dtype),
        grid_spec=pltpu.PrefetchScalarGridSpec(
            num_scalar_prefetch=0,
            grid=grid,
            in_specs=[
                pl.BlockSpec(memory_space=pltpu.MemorySpace.SMEM),               # h scalars
                pl.BlockSpec((H, tnr, LANE), lambda j: (0, j, 0), **stream_kwargs),  # w2 tile
                pl.BlockSpec((1, tnr, LANE), lambda j: (0, j, 0), **stream_kwargs),  # b2 tile
            ],
            out_specs=pl.BlockSpec((B, tnr, LANE), lambda j: (0, j, 0)),
        ),
        compiler_params=pltpu.CompilerParams(
            dimension_semantics=("parallel",),          # independent output tiles
            vmem_limit_bytes=vmem_limit,
        ),
        cost_estimate=pl.CostEstimate(
            flops=2 * B * (H + 1) * N,
            transcendentals=0,
            bytes_accessed=(H + 1) * N * w_isz + B * N * o_isz + B * H * 4,
        ),
    )(h_flat, w2_r, b2_r)

    return out.reshape(B, N)


if __name__ == "__main__":
    # Small, deterministic shapes consistent with the module's forward.
    B = 2          # batch
    D = 32         # input_dim
    H = 3          # fc1 out_features (fixed by the module)
    N = 128 * 37   # = 4736; divisible by 128 (like the real 624,288,000) but NOT by the tile,
                   # so the multi-step grid and ragged/masked last block are exercised.

    key = jax.random.PRNGKey(0)
    kx, k1, k2, k3, k4 = jax.random.split(key, 5)

    # PyTorch nn.Linear-style init: U(-1/sqrt(fan_in), 1/sqrt(fan_in))
    lim1 = 1.0 / jnp.sqrt(D)
    lim2 = 1.0 / jnp.sqrt(H)
    x  = jax.random.normal(kx, (B, D), dtype=jnp.float32)
    w1 = jax.random.uniform(k1, (D, H), jnp.float32, -lim1, lim1)
    b1 = jax.random.uniform(k2, (H,),   jnp.float32, -lim1, lim1)
    w2 = jax.random.uniform(k3, (H, N), jnp.float32, -lim2, lim2)
    b2 = jax.random.uniform(k4, (N,),   jnp.float32, -lim2, lim2)

    # Small tile (16 sublane-rows / 2048 cols) => 3 grid steps with a ragged 5-row tail.
    out = mlp_hypernetwork(x, w1, b1, w2, b2, tile_n=2048)
    out = jax.block_until_ready(out)

    # Pure-JAX reference using the SAME bf16-quantized fc2 weight/bias stream, f32 accumulate
    # (explicit broadcast-sum avoids any reduced-precision matmul path in the reference).
    h_ref = jnp.maximum(x @ w1 + b1, 0.0)
    w2_q = w2.astype(jnp.bfloat16).astype(jnp.float32)
    b2_q = b2.astype(jnp.bfloat16).astype(jnp.float32)
    y_ref = (h_ref[:, :, None] * w2_q[None, :, :]).sum(axis=1) + b2_q

    assert out.shape == (B, N), out.shape
    assert jnp.allclose(out, y_ref, atol=1e-5, rtol=1e-5), "mismatch vs reference"

    print("KERNEL_OK")
</pallas_src>

<mosaic_0001>
module attributes {stable_mosaic.version = 11 : i64} {
  func.func @kernel(%arg0: i32, %arg1: memref<6xf32, #tpu.memory_space<smem>>, %arg2: memref<3x16x128xbf16, #tpu.memory_space<vmem>>, %arg3: memref<1x16x128xbf16, #tpu.memory_space<vmem>>, %arg4: memref<2x16x128xf32, #tpu.memory_space<vmem>>) attributes {dimension_semantics = [#tpu.dimension_semantics<parallel>], iteration_bounds = array<i64: 3>, scalar_prefetch = 0 : i64, scratch_operands = 0 : i64, tpu.core_type = #tpu.core_type<tc>, window_params = [{transform_indices = @transform_0, window_bounds = array<i64: 6>}, {transform_indices = @transform_1, window_bounds = array<i64: 3, 16, 128>}, {transform_indices = @transform_2, window_bounds = array<i64: 1, 16, 128>}, {transform_indices = @transform_3, window_bounds = array<i64: 2, 16, 128>}]} {
    %c0 = arith.constant 0 : index
    %c0_0 = arith.constant 0 : index
    %c0_1 = arith.constant 0 : index
    %0 = vector.load %arg3[%c0, %c0_0, %c0_1] : memref<1x16x128xbf16, #tpu.memory_space<vmem>>, vector<1x16x128xbf16>
    %1 = vector.shape_cast %0 : vector<1x16x128xbf16> to vector<16x128xbf16>
    %2 = arith.extf %1 : vector<16x128xbf16> to vector<16x128xf32>
    %c0_2 = arith.constant 0 : index
    %c0_3 = arith.constant 0 : index
    %c0_4 = arith.constant 0 : index
    %3 = vector.load %arg2[%c0_2, %c0_3, %c0_4] : memref<3x16x128xbf16, #tpu.memory_space<vmem>>, vector<1x16x128xbf16>
    %4 = vector.shape_cast %3 : vector<1x16x128xbf16> to vector<16x128xbf16>
    %5 = arith.extf %4 : vector<16x128xbf16> to vector<16x128xf32>
    %c0_5 = arith.constant 0 : index
    %6 = memref.load %arg1[%c0_5] : memref<6xf32, #tpu.memory_space<smem>>
    %7 = vector.broadcast %6 : f32 to vector<16x128xf32>
    %8 = arith.mulf %7, %5 : vector<16x128xf32>
    %9 = arith.addf %2, %8 : vector<16x128xf32>
    %c3 = arith.constant 3 : index
    %10 = memref.load %arg1[%c3] : memref<6xf32, #tpu.memory_space<smem>>
    %11 = vector.broadcast %10 : f32 to vector<16x128xf32>
    %12 = arith.mulf %11, %5 : vector<16x128xf32>
    %13 = arith.addf %2, %12 : vector<16x128xf32>
    %c1 = arith.constant 1 : index
    %c0_6 = arith.constant 0 : index
    %c0_7 = arith.constant 0 : index
    %14 = vector.load %arg2[%c1, %c0_6, %c0_7] : memref<3x16x128xbf16, #tpu.memory_space<vmem>>, vector<1x16x128xbf16>
    %15 = vector.shape_cast %14 : vector<1x16x128xbf16> to vector<16x128xbf16>
    %16 = arith.extf %15 : vector<16x128xbf16> to vector<16x128xf32>
    %c1_8 = arith.constant 1 : index
    %17 = memref.load %arg1[%c1_8] : memref<6xf32, #tpu.memory_space<smem>>
    %18 = vector.broadcast %17 : f32 to vector<16x128xf32>
    %19 = arith.mulf %18, %16 : vector<16x128xf32>
    %20 = arith.addf %9, %19 : vector<16x128xf32>
    %c4 = arith.constant 4 : index
    %21 = memref.load %arg1[%c4] : memref<6xf32, #tpu.memory_space<smem>>
    %22 = vector.broadcast %21 : f32 to vector<16x128xf32>
    %23 = arith.mulf %22, %16 : vector<16x128xf32>
    %24 = arith.addf %13, %23 : vector<16x128xf32>
    %c2 = arith.constant 2 : index
    %c0_9 = arith.constant 0 : index
    %c0_10 = arith.constant 0 : index
    %25 = vector.load %arg2[%c2, %c0_9, %c0_10] : memref<3x16x128xbf16, #tpu.memory_space<vmem>>, vector<1x16x128xbf16>
    %26 = vector.shape_cast %25 : vector<1x16x128xbf16> to vector<16x128xbf16>
    %27 = arith.extf %26 : vector<16x128xbf16> to vector<16x128xf32>
    %c2_11 = arith.constant 2 : index
    %28 = memref.load %arg1[%c2_11] : memref<6xf32, #tpu.memory_space<smem>>
    %29 = vector.broadcast %28 : f32 to vector<16x128xf32>
    %30 = arith.mulf %29, %27 : vector<16x128xf32>
    %31 = arith.addf %20, %30 : vector<16x128xf32>
    %c5 = arith.constant 5 : index
    %32 = memref.load %arg1[%c5] : memref<6xf32, #tpu.memory_space<smem>>
    %33 = vector.broadcast %32 : f32 to vector<16x128xf32>
    %34 = arith.mulf %33, %27 : vector<16x128xf32>
    %35 = arith.addf %24, %34 : vector<16x128xf32>
    %c0_12 = arith.constant 0 : index
    %c0_13 = arith.constant 0 : index
    %c0_14 = arith.constant 0 : index
    %36 = vector.load %arg4[%c0_12, %c0_13, %c0_14] : memref<2x16x128xf32, #tpu.memory_space<vmem>>, vector<1x16x128xf32>
    %37 = vector.shape_cast %36 : vector<1x16x128xf32> to vector<16x128xf32>
    %38 = vector.shape_cast %31 : vector<16x128xf32> to vector<1x16x128xf32>
    tpu.vector_store %arg4[%c0_12, %c0_13, %c0_14], %38 {strides = array<i32>} : memref<2x16x128xf32, #tpu.memory_space<vmem>>, vector<1x16x128xf32>,
    %c1_15 = arith.constant 1 : index
    %c0_16 = arith.constant 0 : index
    %c0_17 = arith.constant 0 : index
    %39 = vector.load %arg4[%c1_15, %c0_16, %c0_17] : memref<2x16x128xf32, #tpu.memory_space<vmem>>, vector<1x16x128xf32>
    %40 = vector.shape_cast %39 : vector<1x16x128xf32> to vector<16x128xf32>
    %41 = vector.shape_cast %35 : vector<16x128xf32> to vector<1x16x128xf32>
    tpu.vector_store %arg4[%c1_15, %c0_16, %c0_17], %41 {strides = array<i32>} : memref<2x16x128xf32, #tpu.memory_space<vmem>>, vector<1x16x128xf32>,
    return
  }
  func.func @transform_0(%arg0: i32) -> i32 {
    %c0_i32 = arith.constant 0 : i32
    %c0_i32_0 = arith.constant 0 : i32
    return %c0_i32 : i32
  }
  func.func @transform_1(%arg0: i32) -> (i32, i32, i32) {
    %c0_i32 = arith.constant 0 : i32
    %c0_i32_0 = arith.constant 0 : i32
    %c0_i32_1 = arith.constant 0 : i32
    return %c0_i32, %arg0, %c0_i32_0 : i32, i32, i32
  }
  func.func @transform_2(%arg0: i32) -> (i32, i32, i32) {
    %c0_i32 = arith.constant 0 : i32
    %c0_i32_0 = arith.constant 0 : i32
    %c0_i32_1 = arith.constant 0 : i32
    return %c0_i32, %arg0, %c0_i32_0 : i32, i32, i32
  }
  func.func @transform_3(%arg0: i32) -> (i32, i32, i32) {
    %c0_i32 = arith.constant 0 : i32
    %c0_i32_0 = arith.constant 0 : i32
    %c0_i32_1 = arith.constant 0 : i32
    return %c0_i32, %arg0, %c0_i32_0 : i32, i32, i32
  }
}

</mosaic_0001>

<llo_original>
// kernel: tpu_custom_call.1
$region0: #{tpu_custom_call.1}
  #allocation0 [shape = 'u32[]', space=smem, size = 0x4, offset = 0x4, fixed_abs, tag = 'smem constant byte address 0x4 - core index']
  #allocation1 [shape = 'u32[144,128]{1,0:T(1,128)}', space=vmem, size = 0x12000, scoped, tag = 'internal scratch']
  #allocation9 [shape = 's32[]', space=sflag, size = 0x4, offset = 0, fixed_abs, tag = 'sflag constant byte address 0x0 - dummy sync flag']
  %s0 = inlined_call_operand.hbm [shape: f32[6], index: 0, kind: input, shape index: {}]
  %s1 = inlined_call_operand.hbm [shape: bf16[3,37,128], index: 1, kind: input, shape index: {}]
  %s2 = inlined_call_operand.hbm [shape: bf16[1,37,128], index: 2, kind: input, shape index: {}]
  %s3 = inlined_call_operand.vmem [shape: f32[2,37,128], index: 3, kind: output, shape index: {}]
  %s4 = sld [smem:[#allocation0]]
  $region105: #{tpu_custom_call.1} parent=0
    _
  %s6 = ssub.s32 1, %s4
  %s7 = scalar_select 0, %s6, %s4
  $region1: #{tpu_custom_call.1} parent=0
    #allocation2 [shape = 'u8[512]{0}', space=smem, size = 0x200, scoped, tag = 'input window, operand 0, single buffered']
    #allocation3 [shape = 's32[2]{0}', space=sflag, size = 0x8, scoped, tag = 'scoped memory for tpu_custom_call.1']
    #allocation4 [shape = 's32[2]{0}', space=sflag, size = 0x8, scoped, tag = 'scoped memory for tpu_custom_call.1']
    #allocation5 [shape = 'u8[24576]{0}', space=vmem, size = 0x6000, scoped, tag = 'input window, operand 1']
    #allocation6 [shape = 'u8[8192]{0}', space=vmem, size = 0x2000, scoped, tag = 'input window, operand 2']
    #allocation7 [shape = 's32[2]{0}', space=sflag, size = 0x8, scoped, tag = 'scoped memory for tpu_custom_call.1']
    #allocation8 [shape = 'u8[32768]{0}', space=vmem, size = 0x8000, scoped, tag = 'output window, operand 0']
    %8 = vsyncpa [#allocation4], 0
    %9 = vsyncpa [#allocation3], 0
    %s10 = scalar_lea.sflag [#allocation3], 1
    %11 = vsyncpa %s10, 0
    %12 = vsyncpa [#allocation7], 0
    %s13 = scalar_lea.sflag [#allocation7], 1
    %14 = vsyncpa %s13, 0
    loop: start=0, step=1, limit=5
    $region2: #{tpu_custom_call.1} parent=1 // loop_pre_header
      _
    $region3: #{tpu_custom_call.1} parent=1 // loop_header
      %s16 = sphi 0, %s20
      %p17 = scmp.ge.s32.totalorder %s16, 5
      %s24 = sphi 0, %s24
      %s26 = sphi 0, %s24
      %s27 = sphi 0, %s26
      %s41 = sphi 0, %s27
      %s47 = sphi 0, %s49
      %s50 = sphi 0, %s47
      %s51 = sphi 0, %s50
      %s67 = sphi 0, %s51
      %s73 = sphi 0, %s75
      %s76 = sphi 0, %s73
      %s77 = sphi 0, %s76
      %s93 = sphi 0, %s77
      %s99 = sphi 0, %s101
      %s102 = sphi 0, %s99
      %s103 = sphi 0, %s102
      %s119 = sphi 0, %s103
    $region4: #{tpu_custom_call.1} parent=1 // loop_header_branch
      %19 = sbr.rel (%p17) target = $region8
    $region5: #{tpu_custom_call.1} parent=1 // loop_body
      %s21 = ssub.s32 %s16, 1
      %s22 = ssub.s32 %s16, 2
      %s23 = sadd.s32 %s16, 1
      %s25 = sadd.s32 %s24, 1
      %p28 = scmp.eq.s32.totalorder %s16, 2
      %p29 = scmp.ne.s32.totalorder %s24, %s26
      %p30 = scmp.eq.s32.totalorder %s16, 0
      %p31 = por %p29, %p30
      %p32 = scmp.ne.s32.totalorder %s24, %s26
      %p33 = scmp.eq.s32.totalorder %s21, 2
      %p34 = por %p32, %p33
      %p35 = scmp.ne.s32.totalorder %s26, %s27
      %p36 = scmp.eq.s32.totalorder %s21, 0
      %p37 = por %p35, %p36
      %p38 = scmp.ne.s32.totalorder %s26, %s27
      %p39 = scmp.eq.s32.totalorder %s22, 2
      %p40 = por %p38, %p39
      %p42 = scmp.ne.s32.totalorder %s27, %s41
      %p43 = scmp.eq.s32.totalorder %s22, 0
      %p44 = por %p42, %p43
      %s45 = ssub.s32 %s16, %s23
      %p46 = scmp.eq.s32.totalorder %s45, 0
      %s48 = sadd.s32 %s47, 1
      %s49 = scalar_select %p46, %s47, %s48
      %p52 = pneg %p46
      %p53 = scmp.eq.s32.totalorder %s16, 2
      %p54 = por %p52, %p53
      %p55 = scmp.ne.s32.totalorder %s47, %s50
      %p56 = scmp.eq.s32.totalorder %s16, 0
      %p57 = por %p55, %p56
      %p58 = scmp.ne.s32.totalorder %s47, %s50
      %p59 = scmp.eq.s32.totalorder %s21, 2
      %p60 = por %p58, %p59
      %p61 = scmp.ne.s32.totalorder %s50, %s51
      %p62 = scmp.eq.s32.totalorder %s21, 0
      %p63 = por %p61, %p62
      %p64 = scmp.ne.s32.totalorder %s50, %s51
      %p65 = scmp.eq.s32.totalorder %s22, 2
      %p66 = por %p64, %p65
      %p68 = scmp.ne.s32.totalorder %s51, %s67
      %p69 = scmp.eq.s32.totalorder %s22, 0
      %p70 = por %p68, %p69
      %s71 = ssub.s32 %s16, %s23
      %p72 = scmp.eq.s32.totalorder %s71, 0
      %s74 = sadd.s32 %s73, 1
      %s75 = scalar_select %p72, %s73, %s74
      %p78 = pneg %p72
      %p79 = scmp.eq.s32.totalorder %s16, 2
      %p80 = por %p78, %p79
      %p81 = scmp.ne.s32.totalorder %s73, %s76
      %p82 = scmp.eq.s32.totalorder %s16, 0
      %p83 = por %p81, %p82
      %p84 = scmp.ne.s32.totalorder %s73, %s76
      %p85 = scmp.eq.s32.totalorder %s21, 2
      %p86 = por %p84, %p85
      %p87 = scmp.ne.s32.totalorder %s76, %s77
      %p88 = scmp.eq.s32.totalorder %s21, 0
      %p89 = por %p87, %p88
      %p90 = scmp.ne.s32.totalorder %s76, %s77
      %p91 = scmp.eq.s32.totalorder %s22, 2
      %p92 = por %p90, %p91
      %p94 = scmp.ne.s32.totalorder %s77, %s93
      %p95 = scmp.eq.s32.totalorder %s22, 0
      %p96 = por %p94, %p95
      %s97 = ssub.s32 %s16, %s23
      %p98 = scmp.eq.s32.totalorder %s97, 0
      %s100 = sadd.s32 %s99, 1
      %s101 = scalar_select %p98, %s99, %s100
      %p104 = pneg %p98
      %p105 = scmp.eq.s32.totalorder %s16, 2
      %p106 = por %p104, %p105
      %p107 = scmp.ne.s32.totalorder %s99, %s102
      %p108 = scmp.eq.s32.totalorder %s16, 0
      %p109 = por %p107, %p108
      %p110 = scmp.ne.s32.totalorder %s99, %s102
      %p111 = scmp.eq.s32.totalorder %s21, 2
      %p112 = por %p110, %p111
      %p113 = scmp.ne.s32.totalorder %s102, %s103
      %p114 = scmp.eq.s32.totalorder %s21, 0
      %p115 = por %p113, %p114
      %p116 = scmp.ne.s32.totalorder %s102, %s103
      %p117 = scmp.eq.s32.totalorder %s22, 2
      %p118 = por %p116, %p117
      %p120 = scmp.ne.s32.totalorder %s103, %s119
      %p121 = scmp.eq.s32.totalorder %s22, 0
      %p122 = por %p120, %p121
      %p123 = scmp.le.s32.totalorder 1, %s16
      %p124 = scmp.lt.s32.totalorder %s16, 4
      %p125 = pnand %p123, %p124
      %p126 = pneg %p125
      // Predicated region
      $region9: #{tpu_custom_call.1} parent=5 // pred_check
        _
      $region10: #{tpu_custom_call.1} parent=5 // pred_check_branch
        %128 = sbr.rel (%p125) target = $region12
      $region11: #{tpu_custom_call.1} parent=5 // pred_region
        %s129 = ssub.s32 %s16, 1
        // Predicated region
        $region13: #{tpu_custom_call.1} parent=11 // pred_check
          %p130 = pneg %p37
        $region14: #{tpu_custom_call.1} parent=11 // pred_check_branch
          %132 = sbr.rel (%p130) target = $region16
        $region15: #{tpu_custom_call.1} parent=11 // pred_region
          %s134 = ssub.s32 16, 16
          %135 = vsyncadd [#allocation4], %s134
          %138 = dma.hbm_to_smem %s0, 16, [#allocation2], [#allocation4]
        $region16: #{tpu_custom_call.1} parent=11 // pred_fallthru
          _
      $region12: #{tpu_custom_call.1} parent=5 // pred_fallthru
        _
      %p139 = scmp.lt.s32.totalorder %s16, 3
      // Predicated region
      $region17: #{tpu_custom_call.1} parent=5 // pred_check
        %p140 = pneg %p139
      $region18: #{tpu_custom_call.1} parent=5 // pred_check_branch
        %142 = sbr.rel (%p140) target = $region20
      $region19: #{tpu_custom_call.1} parent=5 // pred_region
        // Predicated region
        $region21: #{tpu_custom_call.1} parent=19 // pred_check
          %p143 = pneg %p57
        $region22: #{tpu_custom_call.1} parent=19 // pred_check_branch
          %145 = sbr.rel (%p143) target = $region24
        $region23: #{tpu_custom_call.1} parent=19 // pred_region
          #allocation10 [shape = 'u32[6]{0}', space=smem, size = 0x18, scoped, tag = 'DMA stride descriptor']
          %s146 = sand.u32 %s47, 1
          %s147 = scalar_lea.sflag [#allocation3], %s146
          %s148 = sand.u32 %s47, 1
          %s149 = smul.addr %s148, 24
          %s150 = scalar_lea.vmem [#allocation5], %s149
          %s151 = smul.u32 2, %s16
          %s152 = ssub.s32 5, %s151
          %p153 = scmp.lt.s32.totalorder %s152, 2
          %s154 = scalar_select %p153, %s152, 2
          %s155 = smul.u32 192, %s154
          %s157 = ssub.s32 384, %s155
          %158 = vsyncadd %s147, %s157
          %p159 = scmp.ne.s32.totalorder 0, %s155
          %s160 = smul.addr %s151, 64
          %s161 = scalar_lea.hbm %s1, %s160
          %s162 = smul.u32 4, %s154
          %s163 = smul.u32 %s162, 3
          %s165 = sshll.u32 1, 14
          %s166 = sxor.u32 4294967295, %s165
          %s168 = sld [smem:[#allocation0]]
          %s169 = sadd.s32 2, %s168
          %s171 = sshll.u32 7, 26
          %s172 = sxor.u32 4294967295, %s171
          %s173 = sand.u32 0, %s172
          %s174 = sshll.u32 %s169, 26
          %s175 = sor.u32 %s173, %s174
          %s176 = sshll.u32 %s150, 4
          %s177 = int_to_ptr.vmem [resolvable:$true] %s176
          %s178 = sshll.u32 %s163, 4
          %183 = sst [smem:[#allocation10]] 320
          %s184 = scalar_lea.smem [#allocation10], 1
          %185 = sst [smem:[%s184]] 128
          %s186 = scalar_lea.smem [#allocation10], 2
          %187 = sst [smem:[%s186]] %s154
          %s188 = scalar_lea.smem [#allocation10], 3
          %189 = sst [smem:[%s188]] 64
          %s190 = scalar_lea.smem [#allocation10], 4
          %191 = sst [smem:[%s190]] 64
          %s192 = scalar_lea.smem [#allocation10], 5
          %193 = sst [smem:[%s192]] 4
          %195 = dma.general (%p159), %s161, %s178, %s177, %s147, 131072, [#allocation10], %s175, 0
        $region24: #{tpu_custom_call.1} parent=19 // pred_fallthru
          _
        // Predicated region
        $region25: #{tpu_custom_call.1} parent=19 // pred_check
          %p196 = pneg %p83
        $region26: #{tpu_custom_call.1} parent=19 // pred_check_branch
          %198 = sbr.rel (%p196) target = $region28
        $region27: #{tpu_custom_call.1} parent=19 // pred_region
          %s199 = sand.u32 %s73, 1
          %s200 = scalar_lea.sflag [#allocation7], %s199
          %s201 = sand.u32 %s73, 1
          %s202 = smul.addr %s201, 8
          %s203 = scalar_lea.vmem [#allocation6], %s202
          %s204 = smul.u32 2, %s16
          %s205 = ssub.s32 5, %s204
          %p206 = scmp.lt.s32.totalorder %s205, 2
          %s207 = scalar_select %p206, %s205, 2
          %s208 = smul.u32 64, %s207
          %s210 = ssub.s32 128, %s208
          %211 = vsyncadd %s200, %s210
          %p212 = scmp.ne.s32.totalorder 0, %s208
          %s213 = smul.addr %s204, 64
          %s214 = scalar_lea.hbm %s2, %s213
          %s215 = smul.u32 4, %s207
          %s216 = sshll.u32 %s203, 4
          %s217 = int_to_ptr.vmem [resolvable:$true] %s216
          %s218 = sshll.u32 %s215, 4
          %222 = dma.hbm_to_vmem [thread:$0]  (%p212), %s214, %s218, %s217, %s200, 64, 64, 4
        $region28: #{tpu_custom_call.1} parent=19 // pred_fallthru
          _
      $region20: #{tpu_custom_call.1} parent=5 // pred_fallthru
        _
      %p223 = scmp.le.s32.totalorder 1, %s16
      %p224 = scmp.lt.s32.totalorder %s16, 4
      %p225 = pnand %p223, %p224
      %p226 = pneg %p225
      // Predicated region
      $region29: #{tpu_custom_call.1} parent=5 // pred_check
        _
      $region30: #{tpu_custom_call.1} parent=5 // pred_check_branch
        %228 = sbr.rel (%p225) target = $region32
      $region31: #{tpu_custom_call.1} parent=5 // pred_region
        %s229 = ssub.s32 %s16, 1
        // Predicated region
        $region33: #{tpu_custom_call.1} parent=31 // pred_check
          %p230 = pneg %p37
        $region34: #{tpu_custom_call.1} parent=31 // pred_check_branch
          %232 = sbr.rel (%p230) target = $region36
        $region35: #{tpu_custom_call.1} parent=31 // pred_region
          %233 = dma.done [#allocation4], 16
        $region36: #{tpu_custom_call.1} parent=31 // pred_fallthru
          _
        %s234 = sand.u32 %s50, 1
        %s235 = scalar_lea.sflag [#allocation3], %s234
        %s236 = sand.u32 %s50, 1
        %s237 = smul.addr %s236, 24
        %s238 = scalar_lea.vmem [#allocation5], %s237
        // Predicated region
        $region37: #{tpu_custom_call.1} parent=31 // pred_check
          %p239 = pneg %p63
        $region38: #{tpu_custom_call.1} parent=31 // pred_check_branch
          %241 = sbr.rel (%p239) target = $region40
        $region39: #{tpu_custom_call.1} parent=31 // pred_region
          %242 = dma.done %s235, 384
        $region40: #{tpu_custom_call.1} parent=31 // pred_fallthru
          _
        %s243 = sand.u32 %s76, 1
        %s244 = scalar_lea.sflag [#allocation7], %s243
        %s245 = sand.u32 %s76, 1
        %s246 = smul.addr %s245, 8
        %s247 = scalar_lea.vmem [#allocation6], %s246
        // Predicated region
        $region41: #{tpu_custom_call.1} parent=31 // pred_check
          %p248 = pneg %p89
        $region42: #{tpu_custom_call.1} parent=31 // pred_check_branch
          %250 = sbr.rel (%p248) target = $region44
        $region43: #{tpu_custom_call.1} parent=31 // pred_region
          %251 = dma.done %s244, 128
        $region44: #{tpu_custom_call.1} parent=31 // pred_fallthru
          _
        %252 = sfence
        %p253 = pneg %p37
        %p254 = pneg %p34
        %s255 = sand.u32 %s50, 1
        %s256 = scalar_lea.sflag [#allocation3], %s255
        %s257 = sand.u32 %s50, 1
        %s258 = smul.addr %s257, 24
        %s259 = scalar_lea.vmem [#allocation5], %s258
        %p260 = pneg %p63
        %p261 = pneg %p60
        %s262 = sand.u32 %s76, 1
        %s263 = scalar_lea.sflag [#allocation7], %s262
        %s264 = sand.u32 %s76, 1
        %s265 = smul.addr %s264, 8
        %s266 = scalar_lea.vmem [#allocation6], %s265
        %p267 = pneg %p89
        %p268 = pneg %p86
        %p269 = pneg %p115
        %p270 = pneg %p112
        %s271 = sand.u32 %s102, 1
        %s272 = sand.u32 %s102, 1
        %s273 = smul.addr %s272, 32
        %s274 = scalar_lea.vmem [#allocation8], %s273
        %s275 = smul.u32 2, %s21
        %s276 = ssub.s32 5, %s275
        %p277 = scmp.lt.s32.totalorder %s276, 2
        %s278 = scalar_select %p277, %s276, 2
        %s279 = smul.u32 192, %s278
        %s280 = smul.u32 2, %s21
        %s281 = ssub.s32 5, %s280
        %p282 = scmp.lt.s32.totalorder %s281, 2
        %s283 = scalar_select %p282, %s281, 2
        %s284 = smul.u32 64, %s283
        %s285 = smul.u32 2, %s21
        %s286 = ssub.s32 5, %s285
        %p287 = scmp.lt.s32.totalorder %s286, 2
        %s288 = scalar_select %p287, %s286, 2
        %s289 = smul.u32 256, %s288
        %v290 = vld [vmem:[%s247] sm:$0xf]
        %v291 = vld [vmem:[%s247 + $0x4] sm:$0xf]
        %v292 = vunpack.c.l.bf16 %v290
        %v293 = vunpack.c.l.bf16 %v291
        %v294 = vld [vmem:[%s238] sm:$0xf]
        %v295 = vld [vmem:[%s238 + $0x4] sm:$0xf]
        %v296 = vunpack.c.l.bf16 %v294
        %v297 = vunpack.c.l.bf16 %v295
        %s298 = sld [smem:[#allocation2]]
        %v299 = vstv %s298
        %v300 = vmul.f32 %v299, %v296
        %v301 = vmul.f32 %v299, %v297
        %v302 = vadd.f32 %v292, %v300
        %v303 = vadd.f32 %v293, %v301
        %s304 = sld [smem:[#allocation2 + $0x3]]
        %v305 = vstv %s304
        %v306 = vmul.f32 %v305, %v296
        %v307 = vmul.f32 %v305, %v297
        %v308 = vadd.f32 %v292, %v306
        %v309 = vadd.f32 %v293, %v307
        %s310 = scalar_lea.vmem %s238, 8 [#allocation5]
        %v311 = vld [vmem:[%s310] sm:$0xf]
        %v312 = vld [vmem:[%s310 + $0x4] sm:$0xf]
        %v313 = vunpack.c.l.bf16 %v311
        %v314 = vunpack.c.l.bf16 %v312
        %s315 = sld [smem:[#allocation2 + $0x1]]
        %v316 = vstv %s315
        %v317 = vmul.f32 %v316, %v313
        %v318 = vmul.f32 %v316, %v314
        %v319 = vadd.f32 %v302, %v317
        %v320 = vadd.f32 %v303, %v318
        %s321 = sld [smem:[#allocation2 + $0x4]]
        %v322 = vstv %s321
        %v323 = vmul.f32 %v322, %v313
        %v324 = vmul.f32 %v322, %v314
        %v325 = vadd.f32 %v308, %v323
        %v326 = vadd.f32 %v309, %v324
        %s327 = scalar_lea.vmem %s238, 16 [#allocation5]
        %v328 = vld [vmem:[%s327] sm:$0xf]
        %v329 = vld [vmem:[%s327 + $0x4] sm:$0xf]
        %v330 = vunpack.c.l.bf16 %v328
        %v331 = vunpack.c.l.bf16 %v329
        %s332 = sld [smem:[#allocation2 + $0x2]]
        %v333 = vstv %s332
        %v334 = vmul.f32 %v333, %v330
        %v335 = vmul.f32 %v333, %v331
        %v336 = vadd.f32 %v319, %v334
        %v337 = vadd.f32 %v320, %v335
        %s338 = sld [smem:[#allocation2 + $0x5]]
        %v339 = vstv %s338
        %v340 = vmul.f32 %v339, %v330
        %v341 = vmul.f32 %v339, %v331
        %v342 = vadd.f32 %v325, %v340
        %v343 = vadd.f32 %v326, %v341
        %344 = vst [vmem:[%s274] sm:$0xff] %v336
        %345 = vst [vmem:[%s274 + $0x8] sm:$0xff] %v337
        %s346 = scalar_lea.vmem %s274, 16 [#allocation8]
        %347 = vst [vmem:[%s346] sm:$0xff] %v342
        %348 = vst [vmem:[%s346 + $0x8] sm:$0xff] %v343
        %s349 = sand.u32 %s102, 1
        %s350 = sand.u32 %s102, 1
        %s351 = smul.addr %s350, 32
        %s352 = scalar_lea.vmem [#allocation8], %s351
        // Predicated region
        $region45: #{tpu_custom_call.1} parent=31 // pred_check
          %p353 = pneg %p112
        $region46: #{tpu_custom_call.1} parent=31 // pred_check_branch
          %355 = sbr.rel (%p353) target = $region48
        $region47: #{tpu_custom_call.1} parent=31 // pred_region
          %s356 = smul.u32 2, %s21
          %s357 = ssub.s32 5, %s356
          %p358 = scmp.lt.s32.totalorder %s357, 2
          %s359 = scalar_select %p358, %s357, 2
          %s360 = smul.u32 256, %s359
          %p361 = scmp.ne.s32.totalorder 0, %s360
          %s362 = smul.addr %s356, 8
          %s363 = scalar_lea.vmem %s3, %s362
          // Predicated region
          $region49: #{tpu_custom_call.1} parent=47 // pred_check
            %p364 = pneg %p361
          $region50: #{tpu_custom_call.1} parent=47 // pred_check_branch
            %366 = sbr.rel (%p364) target = $region52
          $region51: #{tpu_custom_call.1} parent=47 // pred_region
            // Predicated region
            $region53: #{tpu_custom_call.1} parent=51 // pred_check
              _
            $region54: #{tpu_custom_call.1} parent=51 // pred_check_branch
              %368 = sbr.rel (0) target = $region56
            $region55: #{tpu_custom_call.1} parent=51 // pred_region
              // Predicated region
              $region75: #{tpu_custom_call.1} parent=55 // pred_check
                _
              $region76: #{tpu_custom_call.1} parent=55 // pred_check_branch
                %426 = sbr.rel (0) target = $region78
              $region77: #{tpu_custom_call.1} parent=55 // pred_region
                %s427 = sshrl.u32 %s359, 1
                // While loop
                $region79: #{tpu_custom_call.1} parent=77 // loop_pre_header
                  _
                $region80: #{tpu_custom_call.1} parent=77 // loop_header
                  %s429 = sphi 0, %s431
                  %p430 = scmp.ge.s32.totalorder %s429, %s427
                  %s434 = sphi 0, %s447
                  %s435 = sphi %s352, %s450
                  %s436 = sphi %s363, %s451
                $region81: #{tpu_custom_call.1} parent=77 // loop_header_branch
                  %433 = sbr.rel (%p430) target = $region85
                $region82: #{tpu_custom_call.1} parent=77 // loop_body
                  %v437 = vld [vmem:[%s435] sm:$0xff]
                  %438 = vst [vmem:[%s436] sm:$0xff] %v437
                  %v439 = vld [vmem:[%s435 + $0x8] sm:$0xff]
                  %440 = vst [vmem:[%s436 + $0x8] sm:$0xff] %v439
                  %v441 = vld [vmem:[%s435 + $0x10] sm:$0xff]
                  %442 = vst [vmem:[%s436 + $0x28] sm:$0xff] %v441
                  %v443 = vld [vmem:[%s435 + $0x18] sm:$0xff]
                  %444 = vst [vmem:[%s436 + $0x30] sm:$0xff] %v443
                  %s445 = sadd.s32 1, %s434
                  %p446 = scmp.ge.s32.totalorder %s445, %s427
                  %s447 = scalar_select %p446, 0, %s445
                  %s448 = smul.u32 %s447, 16
                  %s449 = smul.u32 %s447, 16
                  %s450 = scalar_lea.vmem %s352, %s448 [#allocation8]
                  %s451 = scalar_lea.vmem %s363, %s449
                $region83: #{tpu_custom_call.1} parent=77 // loop_footer
                  %s431 = sadd.s32 %s429, 1
                $region84: #{tpu_custom_call.1} parent=77 // loop_footer_branch
                  %428 = sbr.rel target = $region80
                $region85: #{tpu_custom_call.1} parent=77 // loop_exit
                  _
                %s452 = sshrl.u32 %s359, 1
                %s453 = sand.u32 %s359, 1
                %s454 = smul.u32 %s452, 2
                %s455 = smul.u32 8, %s454
                %s456 = scalar_lea.vmem %s352, %s455 [#allocation8]
                %s457 = smul.u32 8, %s454
                %s458 = scalar_lea.vmem %s363, %s457
                // While loop
                $region86: #{tpu_custom_call.1} parent=77 // loop_pre_header
                  _
                $region87: #{tpu_custom_call.1} parent=77 // loop_header
                  %s460 = sphi 0, %s462
                  %p461 = scmp.ge.s32.totalorder %s460, %s453
                  %s465 = sphi 0, %s474
                  %s466 = sphi %s456, %s477
                  %s467 = sphi %s458, %s478
                $region88: #{tpu_custom_call.1} parent=77 // loop_header_branch
                  %464 = sbr.rel (%p461) target = $region92
                $region89: #{tpu_custom_call.1} parent=77 // loop_body
                  %v468 = vld [vmem:[%s466] sm:$0xff]
                  %469 = vst [vmem:[%s467] sm:$0xff] %v468
                  %v470 = vld [vmem:[%s466 + $0x10] sm:$0xff]
                  %471 = vst [vmem:[%s467 + $0x28] sm:$0xff] %v470
                  %s472 = sadd.s32 1, %s465
                  %p473 = scmp.ge.s32.totalorder %s472, %s453
                  %s474 = scalar_select %p473, 0, %s472
                  %s475 = smul.u32 %s474, 8
                  %s476 = smul.u32 %s474, 8
                  %s477 = scalar_lea.vmem %s456, %s475 [#allocation8]
                  %s478 = scalar_lea.vmem %s458, %s476
                $region90: #{tpu_custom_call.1} parent=77 // loop_footer
                  %s462 = sadd.s32 %s460, 1
                $region91: #{tpu_custom_call.1} parent=77 // loop_footer_branch
                  %459 = sbr.rel target = $region87
                $region92: #{tpu_custom_call.1} parent=77 // loop_exit
                  _
              $region78: #{tpu_custom_call.1} parent=55 // pred_fallthru
                _
              // Predicated region
              $region93: #{tpu_custom_call.1} parent=55 // pred_check
                _
              $region94: #{tpu_custom_call.1} parent=55 // pred_check_branch
                %480 = sbr.rel target = $region96
              $region95: #{tpu_custom_call.1} parent=55 // pred_region
                _
              $region96: #{tpu_custom_call.1} parent=55 // pred_fallthru
                _
            $region56: #{tpu_custom_call.1} parent=51 // pred_fallthru
              _
            // Predicated region
            $region57: #{tpu_custom_call.1} parent=51 // pred_check
              _
            $region58: #{tpu_custom_call.1} parent=51 // pred_check_branch
              %370 = sbr.rel target = $region60
            $region59: #{tpu_custom_call.1} parent=51 // pred_region
              %s372 = ssub.s32 256, 1
              %s373 = sshrl.u32 %s359, 1
              // While loop
              $region61: #{tpu_custom_call.1} parent=59 // loop_pre_header
                _
              $region62: #{tpu_custom_call.1} parent=59 // loop_header
                %s375 = sphi 0, %s377
                %p376 = scmp.ge.s32.totalorder %s375, %s373
                %s380 = sphi 0, %s393
                %s381 = sphi %s352, %s396
                %s382 = sphi %s363, %s397
              $region63: #{tpu_custom_call.1} parent=59 // loop_header_branch
                %379 = sbr.rel (%p376) target = $region67
              $region64: #{tpu_custom_call.1} parent=59 // loop_body
                %v383 = vld [vmem:[%s381] sm:%s372]
                %384 = vst [vmem:[%s382] sm:%s372] %v383
                %v385 = vld [vmem:[%s381 + $0x8] sm:%s372]
                %386 = vst [vmem:[%s382 + $0x8] sm:%s372] %v385
                %v387 = vld [vmem:[%s381 + $0x10] sm:%s372]
                %388 = vst [vmem:[%s382 + $0x28] sm:%s372] %v387
                %v389 = vld [vmem:[%s381 + $0x18] sm:%s372]
                %390 = vst [vmem:[%s382 + $0x30] sm:%s372] %v389
                %s391 = sadd.s32 1, %s380
                %p392 = scmp.ge.s32.totalorder %s391, %s373
                %s393 = scalar_select %p392, 0, %s391
                %s394 = smul.u32 %s393, 16
                %s395 = smul.u32 %s393, 16
                %s396 = scalar_lea.vmem %s352, %s394 [#allocation8]
                %s397 = scalar_lea.vmem %s363, %s395
              $region65: #{tpu_custom_call.1} parent=59 // loop_footer
                %s377 = sadd.s32 %s375, 1
              $region66: #{tpu_custom_call.1} parent=59 // loop_footer_branch
                %374 = sbr.rel target = $region62
              $region67: #{tpu_custom_call.1} parent=59 // loop_exit
                _
              %s398 = sshrl.u32 %s359, 1
              %s399 = sand.u32 %s359, 1
              %s400 = smul.u32 %s398, 2
              %s401 = smul.u32 8, %s400
              %s402 = scalar_lea.vmem %s352, %s401 [#allocation8]
              %s403 = smul.u32 8, %s400
              %s404 = scalar_lea.vmem %s363, %s403
              // While loop
              $region68: #{tpu_custom_call.1} parent=59 // loop_pre_header
                _
              $region69: #{tpu_custom_call.1} parent=59 // loop_header
                %s406 = sphi 0, %s408
                %p407 = scmp.ge.s32.totalorder %s406, %s399
                %s411 = sphi 0, %s420
                %s412 = sphi %s402, %s423
                %s413 = sphi %s404, %s424
              $region70: #{tpu_custom_call.1} parent=59 // loop_header_branch
                %410 = sbr.rel (%p407) target = $region74
              $region71: #{tpu_custom_call.1} parent=59 // loop_body
                %v414 = vld [vmem:[%s412] sm:%s372]
                %415 = vst [vmem:[%s413] sm:%s372] %v414
                %v416 = vld [vmem:[%s412 + $0x10] sm:%s372]
                %417 = vst [vmem:[%s413 + $0x28] sm:%s372] %v416
                %s418 = sadd.s32 1, %s411
                %p419 = scmp.ge.s32.totalorder %s418, %s399
                %s420 = scalar_select %p419, 0, %s418
                %s421 = smul.u32 %s420, 8
                %s422 = smul.u32 %s420, 8
                %s423 = scalar_lea.vmem %s402, %s421 [#allocation8]
                %s424 = scalar_lea.vmem %s404, %s422
              $region72: #{tpu_custom_call.1} parent=59 // loop_footer
                %s408 = sadd.s32 %s406, 1
              $region73: #{tpu_custom_call.1} parent=59 // loop_footer_branch
                %405 = sbr.rel target = $region69
              $region74: #{tpu_custom_call.1} parent=59 // loop_exit
                _
            $region60: #{tpu_custom_call.1} parent=51 // pred_fallthru
              _
          $region52: #{tpu_custom_call.1} parent=47 // pred_fallthru
            _
          %481 = vnop
        $region48: #{tpu_custom_call.1} parent=31 // pred_fallthru
          _
      $region32: #{tpu_custom_call.1} parent=5 // pred_fallthru
        _
      %p482 = scmp.le.s32.totalorder 2, %s16
      // Predicated region
      $region97: #{tpu_custom_call.1} parent=5 // pred_check
        %p483 = pneg %p482
      $region98: #{tpu_custom_call.1} parent=5 // pred_check_branch
        %485 = sbr.rel (%p483) target = $region100
      $region99: #{tpu_custom_call.1} parent=5 // pred_region
        %s486 = ssub.s32 %s16, 2
        // Predicated region
        $region101: #{tpu_custom_call.1} parent=99 // pred_check
          %p487 = pneg %p118
        $region102: #{tpu_custom_call.1} parent=99 // pred_check_branch
          %489 = sbr.rel (%p487) target = $region104
        $region103: #{tpu_custom_call.1} parent=99 // pred_region
          %s490 = sand.u32 %s103, 1
          %s491 = sand.u32 %s103, 1
          %s492 = smul.addr %s491, 32
          %s493 = scalar_lea.vmem [#allocation8], %s492
        $region104: #{tpu_custom_call.1} parent=99 // pred_fallthru
          _
      $region100: #{tpu_custom_call.1} parent=5 // pred_fallthru
        _
    $region6: #{tpu_custom_call.1} parent=1 // loop_footer
      %s20 = sadd.s32 1, %s16
    $region7: #{tpu_custom_call.1} parent=1 // loop_footer_branch
      %15 = sbr.rel target = $region3
    $region8: #{tpu_custom_call.1} parent=1 // loop_exit
      _
    %494 = vsyncpa [#allocation3], 1
    %s495 = scalar_lea.sflag [#allocation3], 1
    %496 = vsyncpa %s495, 1
    %497 = vsyncpa [#allocation7], 1
    %s498 = scalar_lea.sflag [#allocation7], 1
    %499 = vsyncpa %s498, 1
    %500 = vsyncpa [#allocation4], 1
    %s501 = scalar_lea.sflag [#allocation4], 1
    %502 = vsyncpa %s501, 1

</llo_original>
